<compile_context>
chip_gen: v6e
topology: v6e:2x2x1
jax: 0.10.0
libtpu: 0.0.40
codegen_flags: <defaults>
</compile_context>

<pallas_src>
import jax
import jax.numpy as jnp
from jax.experimental import pallas as pl
from jax.experimental.pallas import tpu as pltpu

LANE = 128  # lane width; generated-parameter axis is tiled in multiples of this


def _plan_tiles(num_clients, hidden_dim, total_params,
                vmem_tile_budget_bytes=4 << 20):
    """Pick the generated-parameter tile (multiple of 128) and the padded width.

    Per pipeline step the tiled blocks are double-buffered:
      wp tile  (hidden_dim x tile_n, bf16)
      bp tile  (1 x tile_n, f32)
      out tile (num_clients x tile_n, f32)
    Choose the largest tile_n that keeps them within the VMEM budget.
    """
    tp_pad128 = pl.cdiv(total_params, LANE) * LANE
    per_col = 2 * (hidden_dim * 2 + 4 + num_clients * 4)  # bytes per output column
    tile_n = (vmem_tile_budget_bytes // per_col) // LANE * LANE
    tile_n = max(LANE, min(tile_n, tp_pad128))
    tp_pad = pl.cdiv(tp_pad128, tile_n) * tile_n
    return tile_n, tp_pad


def hypernet_kernel(att_ref, feat_ref,
                    w1_ref, b1_ref,
                    w2_ref, b2_ref,
                    wp_ref, bp_ref,
                    out_ref):
    # weighted_embeddings = attention_matrix @ features   (dropout == identity)
    we = jnp.dot(att_ref[...], feat_ref[...], preferred_element_type=jnp.float32)
    # x = relu(layer1(weighted_embeddings))
    h1 = jnp.dot(we.astype(jnp.bfloat16), w1_ref[...],
                 preferred_element_type=jnp.float32) + b1_ref[...]
    h1 = jnp.maximum(h1, 0.0)
    # x = relu(layer2(x))
    h2 = jnp.dot(h1.astype(jnp.bfloat16), w2_ref[...],
                 preferred_element_type=jnp.float32) + b2_ref[...]
    h2 = jnp.maximum(h2, 0.0)
    # gcn_params tile = x @ wp_tile + bp_tile  (lane-dense, unmasked store)
    out_ref[...] = (jnp.dot(h2.astype(jnp.bfloat16), wp_ref[...],
                            preferred_element_type=jnp.float32)
                    + bp_ref[...]).astype(out_ref.dtype)


def gnn_hypernetwork_forward(features, params):
    """params: dict with att, w1, b1, w2, b2, wp (padded, bf16), bp (padded),
    and python int 'total_params'."""
    M, F = features.shape
    H = params["w1"].shape[1]
    total_params = params["total_params"]
    tile_n, tp_pad = _plan_tiles(M, H, total_params)
    assert params["wp"].shape == (H, tp_pad), (params["wp"].shape, (H, tp_pad))
    grid_n = tp_pad // tile_n

    const2d = lambda shape: pl.BlockSpec(shape, lambda j: (0, 0))

    cost = pl.CostEstimate(
        flops=int(2 * M * ((M * F + F * H + H * H) * grid_n + H * tp_pad)),
        transcendentals=0,
        bytes_accessed=int(params["att"].size * 4 + features.size * 4
                           + params["w1"].size * 2 + params["b1"].size * 4
                           + params["w2"].size * 2 + params["b2"].size * 4
                           + params["wp"].size * 2 + params["bp"].size * 4
                           + M * tp_pad * 4),
    )

    out_padded = pl.pallas_call(
        hypernet_kernel,
        out_shape=jax.ShapeDtypeStruct((M, tp_pad), jnp.float32),
        grid=(grid_n,),
        in_specs=[
            const2d((M, M)),                                   # att
            const2d((M, F)),                                   # features
            const2d((F, H)),                                   # w1 (bf16)
            const2d((1, H)),                                   # b1
            const2d((H, H)),                                   # w2 (bf16)
            const2d((1, H)),                                   # b2
            pl.BlockSpec((H, tile_n), lambda j: (0, j)),       # wp (bf16, padded)
            pl.BlockSpec((1, tile_n), lambda j: (0, j)),       # bp (padded)
        ],
        out_specs=pl.BlockSpec((M, tile_n), lambda j: (0, j)),
        compiler_params=pltpu.CompilerParams(
            dimension_semantics=("parallel",)),
        cost_estimate=cost,
    )(params["att"], features,
      params["w1"], params["b1"],
      params["w2"], params["b2"],
      params["wp"], params["bp"])

    # slice off the lane padding outside the kernel
    return out_padded[:, :total_params]


def init_params(key, num_clients, feature_dim, hidden_dim, gcn_layer_dims):
    total_params = sum(in_f * out_f + out_f for in_f, out_f in gcn_layer_dims)
    _, tp_pad = _plan_tiles(num_clients, hidden_dim, total_params)
    k1, k2, k3, k4, k5, k6 = jax.random.split(key, 6)

    def linear_init(kw, kb, fan_in, fan_out):
        # PyTorch nn.Linear default init: U(-1/sqrt(fan_in), 1/sqrt(fan_in))
        bound = 1.0 / jnp.sqrt(jnp.float32(fan_in))
        w = jax.random.uniform(kw, (fan_in, fan_out), jnp.float32, -bound, bound)
        b = jax.random.uniform(kb, (1, fan_out), jnp.float32, -bound, bound)
        return w, b

    w1, b1 = linear_init(k1, k2, feature_dim, hidden_dim)
    w2, b2 = linear_init(k3, k4, hidden_dim, hidden_dim)
    wp, bp = linear_init(k5, k6, hidden_dim, total_params)

    # pad the generated-parameter axis (zero pad) so stores are lane-dense
    wp_pad = jnp.zeros((hidden_dim, tp_pad), jnp.float32).at[:, :total_params].set(wp)
    bp_pad = jnp.zeros((1, tp_pad), jnp.float32).at[:, :total_params].set(bp)

    att = jnp.eye(num_clients, dtype=jnp.float32)  # nn.Parameter(torch.eye(num_clients))
    return {
        "att": att,
        "w1": w1.astype(jnp.bfloat16), "b1": b1,
        "w2": w2.astype(jnp.bfloat16), "b2": b2,
        "wp": wp_pad.astype(jnp.bfloat16), "bp": bp_pad,
        "total_params": total_params,
    }


def reference_forward(features, p):
    """Pure-JAX reference with the same numerical recipe (bf16 operands, f32 acc)."""
    we = p["att"] @ features
    h1 = jnp.maximum(
        jnp.dot(we.astype(jnp.bfloat16), p["w1"],
                preferred_element_type=jnp.float32) + p["b1"], 0.0)
    h2 = jnp.maximum(
        jnp.dot(h1.astype(jnp.bfloat16), p["w2"],
                preferred_element_type=jnp.float32) + p["b2"], 0.0)
    out = jnp.dot(h2.astype(jnp.bfloat16), p["wp"],
                  preferred_element_type=jnp.float32) + p["bp"]
    return out[:, :p["total_params"]]


if __name__ == "__main__":
    num_clients = 8
    feature_dim = 16
    hidden_dim = 32
    gcn_layer_dims = [(16, 32), (32, 8)]   # total_params = 512+32+256+8 = 808 -> pad 896
    hn_dropout = 0.5                       # inference mode -> identity

    key = jax.random.PRNGKey(0)
    kf, kp = jax.random.split(key)
    features = jax.random.normal(kf, (num_clients, feature_dim), jnp.float32)
    params = init_params(kp, num_clients, feature_dim, hidden_dim, gcn_layer_dims)

    out = gnn_hypernetwork_forward(features, params)
    out = jax.block_until_ready(out)

    ref = reference_forward(features, params)
    total_params = sum(i * o + o for i, o in gcn_layer_dims)
    assert out.shape == (num_clients, total_params), out.shape
    assert jnp.allclose(out, ref, atol=1e-2, rtol=1e-2), float(jnp.max(jnp.abs(out - ref)))

    print("KERNEL_OK")
</pallas_src>

<mosaic_0001>
module attributes {stable_mosaic.version = 11 : i64} {
  func.func @hypernet_kernel(%arg0: i32, %arg1: memref<8x8xf32, #tpu.memory_space<vmem>>, %arg2: memref<8x16xf32, #tpu.memory_space<vmem>>, %arg3: memref<16x32xbf16, #tpu.memory_space<vmem>>, %arg4: memref<1x32xf32, #tpu.memory_space<vmem>>, %arg5: memref<32x32xbf16, #tpu.memory_space<vmem>>, %arg6: memref<1x32xf32, #tpu.memory_space<vmem>>, %arg7: memref<32x896xbf16, #tpu.memory_space<vmem>>, %arg8: memref<1x896xf32, #tpu.memory_space<vmem>>, %arg9: memref<8x896xf32, #tpu.memory_space<vmem>>) attributes {dimension_semantics = [#tpu.dimension_semantics<parallel>], iteration_bounds = array<i64: 1>, scalar_prefetch = 0 : i64, scratch_operands = 0 : i64, tpu.core_type = #tpu.core_type<tc>, window_params = [{pipeline_mode = #tpu.pipeline_mode<synchronous>, transform_indices = @transform_0, window_bounds = array<i64: 8, 8>}, {pipeline_mode = #tpu.pipeline_mode<synchronous>, transform_indices = @transform_1, window_bounds = array<i64: 8, 16>}, {pipeline_mode = #tpu.pipeline_mode<synchronous>, transform_indices = @transform_2, window_bounds = array<i64: 16, 32>}, {pipeline_mode = #tpu.pipeline_mode<synchronous>, transform_indices = @transform_3, window_bounds = array<i64: 1, 32>}, {pipeline_mode = #tpu.pipeline_mode<synchronous>, transform_indices = @transform_4, window_bounds = array<i64: 32, 32>}, {pipeline_mode = #tpu.pipeline_mode<synchronous>, transform_indices = @transform_5, window_bounds = array<i64: 1, 32>}, {transform_indices = @transform_6, window_bounds = array<i64: 32, 896>}, {transform_indices = @transform_7, window_bounds = array<i64: 1, 896>}, {transform_indices = @transform_8, window_bounds = array<i64: 8, 896>}]} {
    %c0 = arith.constant 0 : index
    %c0_0 = arith.constant 0 : index
    %0 = vector.load %arg1[%c0, %c0_0] : memref<8x8xf32, #tpu.memory_space<vmem>>, vector<8x8xf32>
    %c0_1 = arith.constant 0 : index
    %c0_2 = arith.constant 0 : index
    %1 = vector.load %arg2[%c0_1, %c0_2] : memref<8x16xf32, #tpu.memory_space<vmem>>, vector<8x16xf32>
    %cst = arith.constant dense<0.000000e+00> : vector<8x16xf32>
    %2 = tpu.matmul %0, %1, %cst {dimension_numbers = #tpu.dot_dimension_numbers<[1], [0], [0], [1], [0, 0, 1, 1], [], []>} : vector<8x8xf32>, vector<8x16xf32>, vector<8x16xf32> -> vector<8x16xf32>
    %3 = arith.truncf %2 : vector<8x16xf32> to vector<8x16xbf16>
    %c0_3 = arith.constant 0 : index
    %c0_4 = arith.constant 0 : index
    %4 = vector.load %arg3[%c0_3, %c0_4] : memref<16x32xbf16, #tpu.memory_space<vmem>>, vector<16x32xbf16>
    %cst_5 = arith.constant dense<0.000000e+00> : vector<8x32xf32>
    %5 = tpu.matmul %3, %4, %cst_5 {dimension_numbers = #tpu.dot_dimension_numbers<[1], [0], [0], [1], [0, 0, 1, 1], [], []>} : vector<8x16xbf16>, vector<16x32xbf16>, vector<8x32xf32> -> vector<8x32xf32>
    %c0_6 = arith.constant 0 : index
    %c0_7 = arith.constant 0 : index
    %6 = vector.load %arg4[%c0_6, %c0_7] : memref<1x32xf32, #tpu.memory_space<vmem>>, vector<1x32xf32>
    %7 = vector.broadcast %6 : vector<1x32xf32> to vector<8x32xf32>
    %8 = arith.addf %5, %7 : vector<8x32xf32>
    %cst_8 = arith.constant 0.000000e+00 : f32
    %9 = vector.broadcast %cst_8 : f32 to vector<8x32xf32>
    %10 = arith.maximumf %8, %9 : vector<8x32xf32>
    %11 = arith.truncf %10 : vector<8x32xf32> to vector<8x32xbf16>
    %c0_9 = arith.constant 0 : index
    %c0_10 = arith.constant 0 : index
    %12 = vector.load %arg5[%c0_9, %c0_10] : memref<32x32xbf16, #tpu.memory_space<vmem>>, vector<32x32xbf16>
    %cst_11 = arith.constant dense<0.000000e+00> : vector<8x32xf32>
    %13 = tpu.matmul %11, %12, %cst_11 {dimension_numbers = #tpu.dot_dimension_numbers<[1], [0], [0], [1], [0, 0, 1, 1], [], []>} : vector<8x32xbf16>, vector<32x32xbf16>, vector<8x32xf32> -> vector<8x32xf32>
    %c0_12 = arith.constant 0 : index
    %c0_13 = arith.constant 0 : index
    %14 = vector.load %arg6[%c0_12, %c0_13] : memref<1x32xf32, #tpu.memory_space<vmem>>, vector<1x32xf32>
    %15 = vector.broadcast %14 : vector<1x32xf32> to vector<8x32xf32>
    %16 = arith.addf %13, %15 : vector<8x32xf32>
    %cst_14 = arith.constant 0.000000e+00 : f32
    %17 = vector.broadcast %cst_14 : f32 to vector<8x32xf32>
    %18 = arith.maximumf %16, %17 : vector<8x32xf32>
    %19 = arith.truncf %18 : vector<8x32xf32> to vector<8x32xbf16>
    %c0_15 = arith.constant 0 : index
    %c0_16 = arith.constant 0 : index
    %20 = vector.load %arg7[%c0_15, %c0_16] : memref<32x896xbf16, #tpu.memory_space<vmem>>, vector<32x896xbf16>
    %cst_17 = arith.constant dense<0.000000e+00> : vector<8x896xf32>
    %21 = tpu.matmul %19, %20, %cst_17 {dimension_numbers = #tpu.dot_dimension_numbers<[1], [0], [0], [1], [0, 0, 1, 1], [], []>} : vector<8x32xbf16>, vector<32x896xbf16>, vector<8x896xf32> -> vector<8x896xf32>
    %c0_18 = arith.constant 0 : index
    %c0_19 = arith.constant 0 : index
    %22 = vector.load %arg8[%c0_18, %c0_19] : memref<1x896xf32, #tpu.memory_space<vmem>>, vector<1x896xf32>
    %23 = vector.broadcast %22 : vector<1x896xf32> to vector<8x896xf32>
    %24 = arith.addf %21, %23 : vector<8x896xf32>
    %c0_20 = arith.constant 0 : index
    %c0_21 = arith.constant 0 : index
    %25 = vector.load %arg9[%c0_20, %c0_21] : memref<8x896xf32, #tpu.memory_space<vmem>>, vector<8x896xf32>
    tpu.vector_store %arg9[%c0_20, %c0_21], %24 {strides = array<i32>} : memref<8x896xf32, #tpu.memory_space<vmem>>, vector<8x896xf32>,
    return
  }
  func.func @transform_0(%arg0: i32) -> (i32, i32) {
    %c0_i32 = arith.constant 0 : i32
    %c0_i32_0 = arith.constant 0 : i32
    %c0_i32_1 = arith.constant 0 : i32
    return %c0_i32, %c0_i32_0 : i32, i32
  }
  func.func @transform_1(%arg0: i32) -> (i32, i32) {
    %c0_i32 = arith.constant 0 : i32
    %c0_i32_0 = arith.constant 0 : i32
    %c0_i32_1 = arith.constant 0 : i32
    return %c0_i32, %c0_i32_0 : i32, i32
  }
  func.func @transform_2(%arg0: i32) -> (i32, i32) {
    %c0_i32 = arith.constant 0 : i32
    %c0_i32_0 = arith.constant 0 : i32
    %c0_i32_1 = arith.constant 0 : i32
    return %c0_i32, %c0_i32_0 : i32, i32
  }
  func.func @transform_3(%arg0: i32) -> (i32, i32) {
    %c0_i32 = arith.constant 0 : i32
    %c0_i32_0 = arith.constant 0 : i32
    %c0_i32_1 = arith.constant 0 : i32
    return %c0_i32, %c0_i32_0 : i32, i32
  }
  func.func @transform_4(%arg0: i32) -> (i32, i32) {
    %c0_i32 = arith.constant 0 : i32
    %c0_i32_0 = arith.constant 0 : i32
    %c0_i32_1 = arith.constant 0 : i32
    return %c0_i32, %c0_i32_0 : i32, i32
  }
  func.func @transform_5(%arg0: i32) -> (i32, i32) {
    %c0_i32 = arith.constant 0 : i32
    %c0_i32_0 = arith.constant 0 : i32
    %c0_i32_1 = arith.constant 0 : i32
    return %c0_i32, %c0_i32_0 : i32, i32
  }
  func.func @transform_6(%arg0: i32) -> (i32, i32) {
    %c0_i32 = arith.constant 0 : i32
    %c0_i32_0 = arith.constant 0 : i32
    return %c0_i32, %arg0 : i32, i32
  }
  func.func @transform_7(%arg0: i32) -> (i32, i32) {
    %c0_i32 = arith.constant 0 : i32
    %c0_i32_0 = arith.constant 0 : i32
    return %c0_i32, %arg0 : i32, i32
  }
  func.func @transform_8(%arg0: i32) -> (i32, i32) {
    %c0_i32 = arith.constant 0 : i32
    %c0_i32_0 = arith.constant 0 : i32
    return %c0_i32, %arg0 : i32, i32
  }
}

</mosaic_0001>

<llo_original>
// kernel: tpu_custom_call.1
$region0: #{tpu_custom_call.1}
  #allocation0 [shape = 'u32[]', space=smem, size = 0x4, offset = 0x4, fixed_abs, tag = 'smem constant byte address 0x4 - core index']
  #allocation1 [shape = 'u32[144,128]{1,0:T(1,128)}', space=vmem, size = 0x12000, scoped, tag = 'internal scratch']
  %s0 = inlined_call_operand.hbm [shape: f32[8,8], index: 0, kind: input, shape index: {}]
  %s1 = inlined_call_operand.hbm [shape: f32[8,16], index: 1, kind: input, shape index: {}]
  %s2 = inlined_call_operand.hbm [shape: bf16[16,32], index: 2, kind: input, shape index: {}]
  %s3 = inlined_call_operand.vmem [shape: f32[1,32], index: 3, kind: input, shape index: {}]
  %s4 = inlined_call_operand.hbm [shape: bf16[32,32], index: 4, kind: input, shape index: {}]
  %s5 = inlined_call_operand.vmem [shape: f32[1,32], index: 5, kind: input, shape index: {}]
  %s6 = inlined_call_operand.hbm [shape: bf16[32,896], index: 6, kind: input, shape index: {}]
  %s7 = inlined_call_operand.vmem [shape: f32[1,896], index: 7, kind: input, shape index: {}]
  %s8 = inlined_call_operand.hbm [shape: f32[8,896], index: 8, kind: output, shape index: {}]
  %s9 = sld [smem:[#allocation0]]
  $region62: #{tpu_custom_call.1} parent=0
    _
  %s11 = ssub.s32 1, %s9
  %s12 = scalar_select 0, %s11, %s9
  $region1: #{tpu_custom_call.1} parent=0
    #allocation2 [shape = 'u8[4096]{0}', space=vmem, size = 0x1000, scoped, tag = 'input window, operand 0, single buffered']
    #allocation3 [shape = 's32[1]{0}', space=sflag, size = 0x4, scoped, tag = 'scoped memory for tpu_custom_call.1']
    #allocation4 [shape = 's32[1]{0}', space=sflag, size = 0x4, scoped, tag = 'scoped memory for tpu_custom_call.1']
    #allocation5 [shape = 'u8[4096]{0}', space=vmem, size = 0x1000, scoped, tag = 'input window, operand 1, single buffered']
    #allocation6 [shape = 's32[1]{0}', space=sflag, size = 0x4, scoped, tag = 'scoped memory for tpu_custom_call.1']
    #allocation7 [shape = 'u8[4096]{0}', space=vmem, size = 0x1000, scoped, tag = 'input window, operand 2, single buffered']
    #allocation8 [shape = 'u8[8192]{0}', space=vmem, size = 0x2000, scoped, tag = 'input window, operand 4, single buffered']
    #allocation9 [shape = 's32[1]{0}', space=sflag, size = 0x4, scoped, tag = 'scoped memory for tpu_custom_call.1']
    #allocation10 [shape = 'u8[57344]{0}', space=vmem, size = 0xe000, scoped, tag = 'input window, operand 6, single buffered']
    #allocation11 [shape = 'u8[28672]{0}', space=vmem, size = 0x7000, scoped, tag = 'output window, operand 0, single buffered']
    %13 = vsyncpa [#allocation3], 0
    %14 = vsyncpa [#allocation6], 0
    %15 = vsyncpa [#allocation9], 0
    %16 = vsyncpa [#allocation4], 0
    // Predicated region
    $region2: #{tpu_custom_call.1} parent=1 // pred_check
      _
    $region3: #{tpu_custom_call.1} parent=1 // pred_check_branch
      %18 = sbr.rel (0) target = $region5
    $region4: #{tpu_custom_call.1} parent=1 // pred_region
      %s20 = ssub.s32 128, 128
      %21 = vsyncadd [#allocation3], %s20
      %s23 = sshll.u32 [#allocation2], 4
      %s24 = int_to_ptr.vmem [resolvable:$true] %s23
      %26 = dma.hbm_to_vmem [thread:$0]  %s0, 128, %s24, [#allocation3]
    $region5: #{tpu_custom_call.1} parent=1 // pred_fallthru
      _
    // Predicated region
    $region6: #{tpu_custom_call.1} parent=1 // pred_check
      _
    $region7: #{tpu_custom_call.1} parent=1 // pred_check_branch
      %28 = sbr.rel (0) target = $region9
    $region8: #{tpu_custom_call.1} parent=1 // pred_region
      %s30 = ssub.s32 128, 128
      %31 = vsyncadd [#allocation6], %s30
      %s33 = sshll.u32 [#allocation5], 4
      %s34 = int_to_ptr.vmem [resolvable:$true] %s33
      %36 = dma.hbm_to_vmem [thread:$0]  %s1, 128, %s34, [#allocation6]
    $region9: #{tpu_custom_call.1} parent=1 // pred_fallthru
      _
    // Predicated region
    $region10: #{tpu_custom_call.1} parent=1 // pred_check
      _
    $region11: #{tpu_custom_call.1} parent=1 // pred_check_branch
      %38 = sbr.rel (0) target = $region13
    $region12: #{tpu_custom_call.1} parent=1 // pred_region
      %s40 = ssub.s32 128, 128
      %41 = vsyncadd [#allocation6], %s40
      %s42 = sshll.u32 [#allocation7], 4
      %s43 = int_to_ptr.vmem [resolvable:$true] %s42
      %48 = dma.hbm_to_vmem [thread:$0]  %s2, 128, %s43, [#allocation6], 64, 64, 4
    $region13: #{tpu_custom_call.1} parent=1 // pred_fallthru
      _
    // Predicated region
    $region14: #{tpu_custom_call.1} parent=1 // pred_check
      _
    $region15: #{tpu_custom_call.1} parent=1 // pred_check_branch
      %50 = sbr.rel (0) target = $region17
    $region16: #{tpu_custom_call.1} parent=1 // pred_region
      _
    $region17: #{tpu_custom_call.1} parent=1 // pred_fallthru
      _
    // Predicated region
    $region18: #{tpu_custom_call.1} parent=1 // pred_check
      _
    $region19: #{tpu_custom_call.1} parent=1 // pred_check_branch
      %52 = sbr.rel (0) target = $region21
    $region20: #{tpu_custom_call.1} parent=1 // pred_region
      %s54 = ssub.s32 256, 256
      %55 = vsyncadd [#allocation9], %s54
      %s56 = sshll.u32 [#allocation8], 4
      %s57 = int_to_ptr.vmem [resolvable:$true] %s56
      %62 = dma.hbm_to_vmem [thread:$0]  %s4, 256, %s57, [#allocation9], 64, 64, 4
    $region21: #{tpu_custom_call.1} parent=1 // pred_fallthru
      _
    // Predicated region
    $region22: #{tpu_custom_call.1} parent=1 // pred_check
      _
    $region23: #{tpu_custom_call.1} parent=1 // pred_check_branch
      %64 = sbr.rel (0) target = $region25
    $region24: #{tpu_custom_call.1} parent=1 // pred_region
      _
    $region25: #{tpu_custom_call.1} parent=1 // pred_fallthru
      _
    // Predicated region
    $region26: #{tpu_custom_call.1} parent=1 // pred_check
      _
    $region27: #{tpu_custom_call.1} parent=1 // pred_check_branch
      %66 = sbr.rel (0) target = $region29
    $region28: #{tpu_custom_call.1} parent=1 // pred_region
      %s68 = ssub.s32 1792, 1792
      %69 = vsyncadd [#allocation9], %s68
      %s70 = sshll.u32 [#allocation10], 4
      %s71 = int_to_ptr.vmem [resolvable:$true] %s70
      %76 = dma.hbm_to_vmem [thread:$0]  %s6, 1792, %s71, [#allocation9], 448, 448, 28
    $region29: #{tpu_custom_call.1} parent=1 // pred_fallthru
      _
    // Predicated region
    $region30: #{tpu_custom_call.1} parent=1 // pred_check
      _
    $region31: #{tpu_custom_call.1} parent=1 // pred_check_branch
      %78 = sbr.rel (0) target = $region33
    $region32: #{tpu_custom_call.1} parent=1 // pred_region
      _
    $region33: #{tpu_custom_call.1} parent=1 // pred_fallthru
      _
    // Predicated region
    $region34: #{tpu_custom_call.1} parent=1 // pred_check
      _
    $region35: #{tpu_custom_call.1} parent=1 // pred_check_branch
      %80 = sbr.rel (0) target = $region37
    $region36: #{tpu_custom_call.1} parent=1 // pred_region
      %81 = dma.done [#allocation3], 128
    $region37: #{tpu_custom_call.1} parent=1 // pred_fallthru
      _
    // Predicated region
    $region38: #{tpu_custom_call.1} parent=1 // pred_check
      _
    $region39: #{tpu_custom_call.1} parent=1 // pred_check_branch
      %83 = sbr.rel (0) target = $region41
    $region40: #{tpu_custom_call.1} parent=1 // pred_region
      %84 = dma.done [#allocation6], 128
    $region41: #{tpu_custom_call.1} parent=1 // pred_fallthru
      _
    // Predicated region
    $region42: #{tpu_custom_call.1} parent=1 // pred_check
      _
    $region43: #{tpu_custom_call.1} parent=1 // pred_check_branch
      %86 = sbr.rel (0) target = $region45
    $region44: #{tpu_custom_call.1} parent=1 // pred_region
      %87 = dma.done [#allocation6], 128
    $region45: #{tpu_custom_call.1} parent=1 // pred_fallthru
      _
    // Predicated region
    $region46: #{tpu_custom_call.1} parent=1 // pred_check
      _
    $region47: #{tpu_custom_call.1} parent=1 // pred_check_branch
      %89 = sbr.rel (0) target = $region49
    $region48: #{tpu_custom_call.1} parent=1 // pred_region
      %90 = dma.done [#allocation9], 256
    $region49: #{tpu_custom_call.1} parent=1 // pred_fallthru
      _
    // Predicated region
    $region50: #{tpu_custom_call.1} parent=1 // pred_check
      _
    $region51: #{tpu_custom_call.1} parent=1 // pred_check_branch
      %92 = sbr.rel (0) target = $region53
    $region52: #{tpu_custom_call.1} parent=1 // pred_region
      %93 = dma.done [#allocation9], 1792
    $region53: #{tpu_custom_call.1} parent=1 // pred_fallthru
      _
    %v95 = vld [vmem:[#allocation2] sm:$0xff]
    %v96 = vld [vmem:[#allocation5] sm:$0xff]
    %vm97 = vcmask 64512
    %v99 = vsel %vm97, %v95, 0
    %101 = vmatprep.subr.mxu0 0.0
    %102 = vmatpush1.msra.mxu0 0.0
    %103 = vmatprep.subr.mxu0 0.0
    %104 = vmatpush1.msra.mxu0 0.0
    %105 = vmatprep.subr.mxu0 0.0
    %106 = vmatpush1.msra.mxu0 0.0
    %107 = vmatprep.subr.mxu0 0.0
    %108 = vmatpush1.msra.mxu0 0.0
    %109 = vmatprep.subr.mxu0 0.0
    %110 = vmatpush1.msra.mxu0 0.0
    %111 = vmatprep.subr.mxu0 0.0
    %112 = vmatpush1.msra.mxu0 0.0
    %113 = vmatprep.subr.mxu0 0.0
    %114 = vmatpush1.msra.mxu0 0.0
    %115 = vmatprep.subr.mxu0 0.0
    %116 = vmatpush1.msra.mxu0 0.0
    %117 = vmatprep.subr.mxu0 0.0
    %118 = vmatpush1.msra.mxu0 0.0
    %119 = vmatprep.subr.mxu0 0.0
    %120 = vmatpush1.msra.mxu0 0.0
    %121 = vmatprep.subr.mxu0 0.0
    %122 = vmatpush1.msra.mxu0 0.0
    %123 = vmatprep.subr.mxu0 0.0
    %124 = vmatpush1.msra.mxu0 0.0
    %125 = vmatprep.subr.mxu0 0.0
    %126 = vmatpush1.msra.mxu0 0.0
    %127 = vmatprep.subr.mxu0 0.0
    %128 = vmatpush1.msra.mxu0 0.0
    %129 = vmatprep.subr.mxu0 0.0
    %130 = vmatpush1.msra.mxu0 0.0
    %131 = vmatprep.subr.mxu0 0.0
    %132 = vmatpush1.msra.mxu0 %v96
    %133 = vmatprep.subr.mxu0 0.0
    %134 = vmatpush2.msra.mxu0 0.0
    %135 = vmatprep.subr.mxu0 0.0
    %136 = vmatpush2.msra.mxu0 0.0
    %137 = vmatprep.subr.mxu0 0.0
    %138 = vmatpush2.msra.mxu0 0.0
    %139 = vmatprep.subr.mxu0 0.0
    %140 = vmatpush2.msra.mxu0 0.0
    %141 = vmatprep.subr.mxu0 0.0
    %142 = vmatpush2.msra.mxu0 0.0
    %143 = vmatprep.subr.mxu0 0.0
    %144 = vmatpush2.msra.mxu0 0.0
    %145 = vmatprep.subr.mxu0 0.0
    %146 = vmatpush2.msra.mxu0 0.0
    %147 = vmatprep.subr.mxu0 0.0
    %148 = vmatpush2.msra.mxu0 0.0
    %149 = vmatprep.subr.mxu0 0.0
    %150 = vmatpush2.msra.mxu0 0.0
    %151 = vmatprep.subr.mxu0 0.0
    %152 = vmatpush2.msra.mxu0 0.0
    %153 = vmatprep.subr.mxu0 0.0
    %154 = vmatpush2.msra.mxu0 0.0
    %155 = vmatprep.subr.mxu0 0.0
    %156 = vmatpush2.msra.mxu0 0.0
    %157 = vmatprep.subr.mxu0 0.0
    %158 = vmatpush2.msra.mxu0 0.0
    %159 = vmatprep.subr.mxu0 0.0
    %160 = vmatpush2.msra.mxu0 0.0
    %161 = vmatprep.subr.mxu0 0.0
    %162 = vmatpush2.msra.mxu0 0.0
    %163 = vmatprep.subr.mxu0 0.0
    %164 = vmatpush2.msra.mxu0 0.0
    %165 = vmatprep.mubr.f32.mxu0 0.0
    %166 = vmatmul.mubr.f32.gmra.mxu0 %v99
    %v167 = vpop.f32.mrf.mxu0
    %v168 = vadd.f32 0.0, %v167
    %v169 = vpop.f32.mrf.mxu0
    %170 = vdwg.mxu0
    %v171 = vpack.c.bf16 %v168, %v168
    %v172 = vld [vmem:[#allocation7] sm:$0xf]
    %v173 = vld [vmem:[#allocation7 + $0x4] sm:$0xf]
    %v174 = vld [vmem:[%s3] sm:$0x1]
    %v176 = vlaneseq
    %v177 = vshrl.u32 %v176, 7
    %v178 = vsub.s32 0, %v177
    %v179 = vrot.slane %v174, %v178
    %v183 = vunpack.c.l.b16 %v172
    %v184 = vunpack.c.l.b16 %v173
    %v185 = vpack.c.b16 %v184, %v183
    %vm187 = vcmask 130048
    %v189 = vsel %vm187, %v171, 0
    %191 = vmatprep.subr.bf16.mxu0 0
    %192 = vmatpush1.bf16.msra.mxu0 0
    %193 = vmatprep.subr.bf16.mxu0 0
    %194 = vmatpush1.bf16.msra.mxu0 0
    %195 = vmatprep.subr.bf16.mxu0 0
    %196 = vmatpush1.bf16.msra.mxu0 0
    %197 = vmatprep.subr.bf16.mxu0 0
    %198 = vmatpush1.bf16.msra.mxu0 0
    %199 = vmatprep.subr.bf16.mxu0 0
    %200 = vmatpush1.bf16.msra.mxu0 0
    %201 = vmatprep.subr.bf16.mxu0 0
    %202 = vmatpush1.bf16.msra.mxu0 0
    %203 = vmatprep.subr.bf16.mxu0 0
    %204 = vmatpush1.bf16.msra.mxu0 0
    %205 = vmatprep.subr.bf16.mxu0 0
    %206 = vmatpush1.bf16.msra.mxu0 %v185
    %207 = vmatprep.subr.bf16.mxu0 0
    %208 = vmatpush2.bf16.msra.mxu0 0
    %209 = vmatprep.subr.bf16.mxu0 0
    %210 = vmatpush2.bf16.msra.mxu0 0
    %211 = vmatprep.subr.bf16.mxu0 0
    %212 = vmatpush2.bf16.msra.mxu0 0
    %213 = vmatprep.subr.bf16.mxu0 0
    %214 = vmatpush2.bf16.msra.mxu0 0
    %215 = vmatprep.subr.bf16.mxu0 0
    %216 = vmatpush2.bf16.msra.mxu0 0
    %217 = vmatprep.subr.bf16.mxu0 0
    %218 = vmatpush2.bf16.msra.mxu0 0
    %219 = vmatprep.subr.bf16.mxu0 0
    %220 = vmatpush2.bf16.msra.mxu0 0
    %221 = vmatprep.subr.bf16.mxu0 0
    %222 = vmatpush2.bf16.msra.mxu0 0
    %223 = vmatprep.mubr.bf16.mxu0 0
    %224 = vmatmul.mubr.bf16.gmra.mxu0 %v189
    %v225 = vpop.f32.mrf.mxu0
    %v226 = vadd.f32 %v179, %v225
    %v227 = vpop.f32.mrf.mxu0
    %v228 = vpop.f32.mrf.mxu0
    %v229 = vpop.f32.mrf.mxu0
    %230 = vdwg.mxu0
    %v231 = vmax.f32 %v226, 0.0
    %v232 = vpack.c.bf16 %v231, %v231
    %v233 = vld [vmem:[#allocation8] sm:$0xf]
    %v234 = vld [vmem:[#allocation8 + $0x4] sm:$0xf]
    %v235 = vld [vmem:[#allocation8 + $0x8] sm:$0xf]
    %v236 = vld [vmem:[#allocation8 + $0xc] sm:$0xf]
    %v237 = vld [vmem:[%s5] sm:$0x1]
    %v239 = vlaneseq
    %v240 = vshrl.u32 %v239, 7
    %v241 = vsub.s32 0, %v240
    %v242 = vrot.slane %v237, %v241
    %v248 = vunpack.c.l.b16 %v233
    %v249 = vunpack.c.l.b16 %v234
    %v250 = vunpack.c.l.b16 %v235
    %v251 = vunpack.c.l.b16 %v236
    %v252 = vpack.c.b16 %v249, %v248
    %v253 = vpack.c.b16 %v251, %v250
    %vm256 = vcmask 261120
    %v258 = vsel %vm256, %v232, 0
    %260 = vmatprep.subr.bf16.mxu0 0
    %261 = vmatpush1.bf16.msra.mxu0 0
    %262 = vmatprep.subr.bf16.mxu0 0
    %263 = vmatpush1.bf16.msra.mxu0 0
    %264 = vmatprep.subr.bf16.mxu0 0
    %265 = vmatpush1.bf16.msra.mxu0 0
    %266 = vmatprep.subr.bf16.mxu0 0
    %267 = vmatpush1.bf16.msra.mxu0 0
    %268 = vmatprep.subr.bf16.mxu0 0
    %269 = vmatpush1.bf16.msra.mxu0 0
    %270 = vmatprep.subr.bf16.mxu0 0
    %271 = vmatpush1.bf16.msra.mxu0 0
    %272 = vmatprep.subr.bf16.mxu0 0
    %273 = vmatpush1.bf16.msra.mxu0 %v253
    %274 = vmatprep.subr.bf16.mxu0 0
    %275 = vmatpush1.bf16.msra.mxu0 %v252
    %276 = vmatprep.subr.bf16.mxu0 0
    %277 = vmatpush2.bf16.msra.mxu0 0
    %278 = vmatprep.subr.bf16.mxu0 0
    %279 = vmatpush2.bf16.msra.mxu0 0
    %280 = vmatprep.subr.bf16.mxu0 0
    %281 = vmatpush2.bf16.msra.mxu0 0
    %282 = vmatprep.subr.bf16.mxu0 0
    %283 = vmatpush2.bf16.msra.mxu0 0
    %284 = vmatprep.subr.bf16.mxu0 0
    %285 = vmatpush2.bf16.msra.mxu0 0
    %286 = vmatprep.subr.bf16.mxu0 0
    %287 = vmatpush2.bf16.msra.mxu0 0
    %288 = vmatprep.subr.bf16.mxu0 0
    %289 = vmatpush2.bf16.msra.mxu0 0
    %290 = vmatprep.subr.bf16.mxu0 0
    %291 = vmatpush2.bf16.msra.mxu0 0
    %292 = vmatprep.mubr.bf16.mxu0 0
    %293 = vmatmul.mubr.bf16.gmra.mxu0 %v258
    %v294 = vpop.f32.mrf.mxu0
    %v295 = vadd.f32 %v242, %v294
    %v296 = vpop.f32.mrf.mxu0
    %v297 = vpop.f32.mrf.mxu0
    %v298 = vpop.f32.mrf.mxu0
    %299 = vdwg.mxu0
    %v300 = vmax.f32 %v295, 0.0
    %v301 = vpack.c.bf16 %v300, %v300
    %v302 = vld [vmem:[#allocation10] sm:$0xff]
    %v303 = vld [vmem:[#allocation10 + $0x8] sm:$0xff]
    %v304 = vld [vmem:[#allocation10 + $0x10] sm:$0xff]
    %v305 = vld [vmem:[#allocation10 + $0x18] sm:$0xf]
    %v306 = vld [vmem:[#allocation10 + $0x1c] sm:$0xff]
    %v307 = vld [vmem:[#allocation10 + $0x24] sm:$0xff]
    %v308 = vld [vmem:[#allocation10 + $0x2c] sm:$0xff]
    %v309 = vld [vmem:[#allocation10 + $0x34] sm:$0xf]
    %v310 = vld [vmem:[#allocation10 + $0x38] sm:$0xff]
    %v311 = vld [vmem:[#allocation10 + $0x40] sm:$0xff]
    %v312 = vld [vmem:[#allocation10 + $0x48] sm:$0xff]
    %v313 = vld [vmem:[#allocation10 + $0x50] sm:$0xf]
    %v314 = vld [vmem:[#allocation10 + $0x54] sm:$0xff]
    %v315 = vld [vmem:[#allocation10 + $0x5c] sm:$0xff]
    %v316 = vld [vmem:[#allocation10 + $0x64] sm:$0xff]
    %v317 = vld [vmem:[#allocation10 + $0x6c] sm:$0xf]
    %v318 = vld [vmem:[%s7] sm:$0xff]
    %v320 = vlaneseq
    %v321 = vshrl.u32 %v320, 7
    %v322 = vsub.s32 0, %v321
    %v323 = vrot.slane %v318, %v322
    %v324 = vlaneseq
    %v325 = vshrl.u32 %v324, 7
    %v326 = vsub.s32 1, %v325
    %v327 = vrot.slane %v318, %v326
    %v328 = vlaneseq
    %v329 = vshrl.u32 %v328, 7
    %v330 = vsub.s32 2, %v329
    %v331 = vrot.slane %v318, %v330
    %v332 = vlaneseq
    %v333 = vshrl.u32 %v332, 7
    %v334 = vsub.s32 3, %v333
    %v335 = vrot.slane %v318, %v334
    %v336 = vlaneseq
    %v337 = vshrl.u32 %v336, 7
    %v338 = vsub.s32 4, %v337
    %v339 = vrot.slane %v318, %v338
    %v340 = vlaneseq
    %v341 = vshrl.u32 %v340, 7
    %v342 = vsub.s32 5, %v341
    %v343 = vrot.slane %v318, %v342
    %v344 = vlaneseq
    %v345 = vshrl.u32 %v344, 7
    %v346 = vsub.s32 6, %v345
    %v347 = vrot.slane %v318, %v346
    %v371 = vunpack.c.l.b16 %v302
    %v372 = vunpack.c.h.b16 %v302
    %v373 = vunpack.c.l.b16 %v303
    %v374 = vunpack.c.h.b16 %v303
    %v375 = vunpack.c.l.b16 %v304
    %v376 = vunpack.c.h.b16 %v304
    %v377 = vunpack.c.l.b16 %v305
    %v378 = vunpack.c.l.b16 %v306
    %v379 = vunpack.c.h.b16 %v306
    %v380 = vunpack.c.l.b16 %v307
    %v381 = vunpack.c.h.b16 %v307
    %v382 = vunpack.c.l.b16 %v308
    %v383 = vunpack.c.h.b16 %v308
    %v384 = vunpack.c.l.b16 %v309
    %v385 = vunpack.c.l.b16 %v310
    %v386 = vunpack.c.h.b16 %v310
    %v387 = vunpack.c.l.b16 %v311
    %v388 = vunpack.c.h.b16 %v311
    %v389 = vunpack.c.l.b16 %v312
    %v390 = vunpack.c.h.b16 %v312
    %v391 = vunpack.c.l.b16 %v313
    %v392 = vunpack.c.l.b16 %v314
    %v393 = vunpack.c.h.b16 %v314
    %v394 = vunpack.c.l.b16 %v315
    %v395 = vunpack.c.h.b16 %v315
    %v396 = vunpack.c.l.b16 %v316
    %v397 = vunpack.c.h.b16 %v316
    %v398 = vunpack.c.l.b16 %v317
    %v399 = vpack.c.b16 %v378, %v371
    %v400 = vpack.c.b16 %v379, %v372
    %v401 = vpack.c.b16 %v380, %v373
    %v402 = vpack.c.b16 %v381, %v374
    %v403 = vpack.c.b16 %v382, %v375
    %v404 = vpack.c.b16 %v383, %v376
    %v405 = vpack.c.b16 %v384, %v377
    %v406 = vpack.c.b16 %v392, %v385
    %v407 = vpack.c.b16 %v393, %v386
    %v408 = vpack.c.b16 %v394, %v387
    %v409 = vpack.c.b16 %v395, %v388
    %v410 = vpack.c.b16 %v396, %v389
    %v411 = vpack.c.b16 %v397, %v390
    %v412 = vpack.c.b16 %v398, %v391
    %v428 = vsel %vm256, %v301, 0
    %430 = vmatprep.subr.bf16.mxu0 0
    %431 = vmatpush1.bf16.msra.mxu0 0
    %432 = vmatprep.subr.bf16.mxu0 0
    %433 = vmatpush1.bf16.msra.mxu0 0
    %434 = vmatprep.subr.bf16.mxu0 0
    %435 = vmatpush1.bf16.msra.mxu0 0
    %436 = vmatprep.subr.bf16.mxu0 0
    %437 = vmatpush1.bf16.msra.mxu0 0
    %438 = vmatprep.subr.bf16.mxu0 0
    %439 = vmatpush1.bf16.msra.mxu0 0
    %440 = vmatprep.subr.bf16.mxu0 0
    %441 = vmatpush1.bf16.msra.mxu0 0
    %442 = vmatprep.subr.bf16.mxu0 %v407
    %443 = vmatpush1.bf16.msra.mxu0 %v406
    %444 = vmatprep.subr.bf16.mxu0 %v400
    %445 = vmatpush1.bf16.msra.mxu0 %v399
    %446 = vmatprep.subr.bf16.mxu0 0
    %447 = vmatpush2.bf16.msra.mxu0 0
    %448 = vmatprep.subr.bf16.mxu0 0
    %449 = vmatpush2.bf16.msra.mxu0 0
    %450 = vmatprep.subr.bf16.mxu0 0
    %451 = vmatpush2.bf16.msra.mxu0 0
    %452 = vmatprep.subr.bf16.mxu0 0
    %453 = vmatpush2.bf16.msra.mxu0 0
    %454 = vmatprep.subr.bf16.mxu0 0
    %455 = vmatpush2.bf16.msra.mxu0 0
    %456 = vmatprep.subr.bf16.mxu0 0
    %457 = vmatpush2.bf16.msra.mxu0 0
    %458 = vmatprep.subr.bf16.mxu0 0
    %459 = vmatpush2.bf16.msra.mxu0 0
    %460 = vmatprep.subr.bf16.mxu0 0
    %461 = vmatpush2.bf16.msra.mxu0 0
    %462 = vmatprep.mubr.bf16.mxu0 0
    %463 = vmatmul.mubr.bf16.gmra.mxu0 %v428
    %v464 = vpop.f32.mrf.mxu0
    %v465 = vadd.f32 %v323, %v464
    %v466 = vpop.f32.mrf.mxu0
    %v467 = vadd.f32 %v327, %v466
    %v468 = vpop.f32.mrf.mxu0
    %v469 = vpop.f32.mrf.mxu0
    %470 = vdwg.mxu0
    %471 = vmatprep.subr.bf16.mxu0 0
    %472 = vmatpush1.bf16.msra.mxu0 0
    %473 = vmatprep.subr.bf16.mxu0 0
    %474 = vmatpush1.bf16.msra.mxu0 0
    %475 = vmatprep.subr.bf16.mxu0 0
    %476 = vmatpush1.bf16.msra.mxu0 0
    %477 = vmatprep.subr.bf16.mxu0 0
    %478 = vmatpush1.bf16.msra.mxu0 0
    %479 = vmatprep.subr.bf16.mxu0 0
    %480 = vmatpush1.bf16.msra.mxu0 0
    %481 = vmatprep.subr.bf16.mxu0 0
    %482 = vmatpush1.bf16.msra.mxu0 0
    %483 = vmatprep.subr.bf16.mxu0 %v409
    %484 = vmatpush1.bf16.msra.mxu0 %v408
    %485 = vmatprep.subr.bf16.mxu0 %v402
    %486 = vmatpush1.bf16.msra.mxu0 %v401
    %487 = vmatprep.subr.bf16.mxu0 0
    %488 = vmatpush2.bf16.msra.mxu0 0
    %489 = vmatprep.subr.bf16.mxu0 0
    %490 = vmatpush2.bf16.msra.mxu0 0
    %491 = vmatprep.subr.bf16.mxu0 0
    %492 = vmatpush2.bf16.msra.mxu0 0
    %493 = vmatprep.subr.bf16.mxu0 0
    %494 = vmatpush2.bf16.msra.mxu0 0
    %495 = vmatprep.subr.bf16.mxu0 0
    %496 = vmatpush2.bf16.msra.mxu0 0
    %497 = vmatprep.subr.bf16.mxu0 0
    %498 = vmatpush2.bf16.msra.mxu0 0
    %499 = vmatprep.subr.bf16.mxu0 0
    %500 = vmatpush2.bf16.msra.mxu0 0
    %501 = vmatprep.subr.bf16.mxu0 0
    %502 = vmatpush2.bf16.msra.mxu0 0
    %503 = vmatprep.mubr.bf16.mxu0 0
    %504 = vmatmul.mubr.bf16.gmra.mxu0 %v428
    %v505 = vpop.f32.mrf.mxu0
    %v506 = vadd.f32 %v331, %v505
    %v507 = vpop.f32.mrf.mxu0
    %v508 = vadd.f32 %v335, %v507
    %v509 = vpop.f32.mrf.mxu0
    %v510 = vpop.f32.mrf.mxu0
    %511 = vdwg.mxu0
    %512 = vmatprep.subr.bf16.mxu0 0
    %513 = vmatpush1.bf16.msra.mxu0 0
    %514 = vmatprep.subr.bf16.mxu0 0
    %515 = vmatpush1.bf16.msra.mxu0 0
    %516 = vmatprep.subr.bf16.mxu0 0
    %517 = vmatpush1.bf16.msra.mxu0 0
    %518 = vmatprep.subr.bf16.mxu0 0
    %519 = vmatpush1.bf16.msra.mxu0 0
    %520 = vmatprep.subr.bf16.mxu0 0
    %521 = vmatpush1.bf16.msra.mxu0 0
    %522 = vmatprep.subr.bf16.mxu0 0
    %523 = vmatpush1.bf16.msra.mxu0 0
    %524 = vmatprep.subr.bf16.mxu0 %v411
    %525 = vmatpush1.bf16.msra.mxu0 %v410
    %526 = vmatprep.subr.bf16.mxu0 %v404
    %527 = vmatpush1.bf16.msra.mxu0 %v403
    %528 = vmatprep.subr.bf16.mxu0 0
    %529 = vmatpush2.bf16.msra.mxu0 0
    %530 = vmatprep.subr.bf16.mxu0 0
    %531 = vmatpush2.bf16.msra.mxu0 0
    %532 = vmatprep.subr.bf16.mxu0 0
    %533 = vmatpush2.bf16.msra.mxu0 0
    %534 = vmatprep.subr.bf16.mxu0 0
    %535 = vmatpush2.bf16.msra.mxu0 0
    %536 = vmatprep.subr.bf16.mxu0 0
    %537 = vmatpush2.bf16.msra.mxu0 0
    %538 = vmatprep.subr.bf16.mxu0 0
    %539 = vmatpush2.bf16.msra.mxu0 0
    %540 = vmatprep.subr.bf16.mxu0 0
    %541 = vmatpush2.bf16.msra.mxu0 0
    %542 = vmatprep.subr.bf16.mxu0 0
    %543 = vmatpush2.bf16.msra.mxu0 0
    %544 = vmatprep.mubr.bf16.mxu0 0
    %545 = vmatmul.mubr.bf16.gmra.mxu0 %v428
    %v546 = vpop.f32.mrf.mxu0
    %v547 = vadd.f32 %v339, %v546
    %v548 = vpop.f32.mrf.mxu0
    %v549 = vadd.f32 %v343, %v548
    %v550 = vpop.f32.mrf.mxu0
    %v551 = vpop.f32.mrf.mxu0
    %552 = vdwg.mxu0
    %553 = vmatprep.subr.bf16.mxu0 0
    %554 = vmatpush1.bf16.msra.mxu0 0
    %555 = vmatprep.subr.bf16.mxu0 0
    %556 = vmatpush1.bf16.msra.mxu0 0
    %557 = vmatprep.subr.bf16.mxu0 0
    %558 = vmatpush1.bf16.msra.mxu0 0
    %559 = vmatprep.subr.bf16.mxu0 0
    %560 = vmatpush1.bf16.msra.mxu0 0
    %561 = vmatprep.subr.bf16.mxu0 0
    %562 = vmatpush1.bf16.msra.mxu0 0
    %563 = vmatprep.subr.bf16.mxu0 0
    %564 = vmatpush1.bf16.msra.mxu0 0
    %565 = vmatprep.subr.bf16.mxu0 0
    %566 = vmatpush1.bf16.msra.mxu0 %v412
    %567 = vmatprep.subr.bf16.mxu0 0
    %568 = vmatpush1.bf16.msra.mxu0 %v405
    %569 = vmatprep.subr.bf16.mxu0 0
    %570 = vmatpush2.bf16.msra.mxu0 0
    %571 = vmatprep.subr.bf16.mxu0 0
    %572 = vmatpush2.bf16.msra.mxu0 0
    %573 = vmatprep.subr.bf16.mxu0 0
    %574 = vmatpush2.bf16.msra.mxu0 0
    %575 = vmatprep.subr.bf16.mxu0 0
    %576 = vmatpush2.bf16.msra.mxu0 0
    %577 = vmatprep.subr.bf16.mxu0 0
    %578 = vmatpush2.bf16.msra.mxu0 0
    %579 = vmatprep.subr.bf16.mxu0 0
    %580 = vmatpush2.bf16.msra.mxu0 0
    %581 = vmatprep.subr.bf16.mxu0 0
    %582 = vmatpush2.bf16.msra.mxu0 0
    %583 = vmatprep.subr.bf16.mxu0 0
    %584 = vmatpush2.bf16.msra.mxu0 0
    %585 = vmatprep.mubr.bf16.mxu0 0
    %586 = vmatmul.mubr.bf16.gmra.mxu0 %v428
    %v587 = vpop.f32.mrf.mxu0
    %v588 = vadd.f32 %v347, %v587
    %v589 = vpop.f32.mrf.mxu0
    %v590 = vpop.f32.mrf.mxu0
    %v591 = vpop.f32.mrf.mxu0
    %592 = vdwg.mxu0
    %593 = vst [vmem:[#allocation11] sm:$0xff] %v465
    %594 = vst [vmem:[#allocation11 + $0x8] sm:$0xff] %v467
    %595 = vst [vmem:[#allocation11 + $0x10] sm:$0xff] %v506
    %596 = vst [vmem:[#allocation11 + $0x18] sm:$0xff] %v508
    %597 = vst [vmem:[#allocation11 + $0x20] sm:$0xff] %v547
    %598 = vst [vmem:[#allocation11 + $0x28] sm:$0xff] %v549
    %599 = vst [vmem:[#allocation11 + $0x30] sm:$0xff] %v588
    // Predicated region
    $region54: #{tpu_custom_call.1} parent=1 // pred_check
      _
    $region55: #{tpu_custom_call.1} parent=1 // pred_check_branch
      %601 = sbr.rel (0) target = $region57
    $region56: #{tpu_custom_call.1} parent=1 // pred_region
      %s603 = ssub.s32 896, 896
      %604 = vsyncadd [#allocation4], %s603
      %s606 = sshll.u32 [#allocation11], 4
      %s607 = int_to_ptr.vmem [resolvable:$true] %s606
      %609 = dma.vmem_to_hbm [thread:$0]  %s607, 896, %s8, [#allocation4]
    $region57: #{tpu_custom_call.1} parent=1 // pred_fallthru
      _
    // Predicated region
    $region58: #{tpu_custom_call.1} parent=1 // pred_check
      _
    $region59: #{tpu_custom_call.1} parent=1 // pred_check_branch
      %611 = sbr.rel (0) target = $region61
    $region60: #{tpu_custom_call.1} parent=1 // pred_region
      %612 = dma.done [#allocation4], 896
    $region61: #{tpu_custom_call.1} parent=1 // pred_fallthru
      _
    %613 = vsyncpa [#allocation3], 1
    %614 = vsyncpa [#allocation6], 1
    %615 = vsyncpa [#allocation9], 1
    %616 = vsyncpa [#allocation4], 1

</llo_original>
